<compile_context>
chip_gen: v7x
topology: tpu7x:2x2x1
jax: 0.10.0
libtpu: 0.0.40
codegen_flags: <defaults>
</compile_context>

<pallas_src>
import functools

import jax
import jax.numpy as jnp
from jax.experimental import pallas as pl
from jax.experimental.pallas import tpu as pltpu


def _round_up(x, m):
    return ((x + m - 1) // m) * m


# -----------------------------------------------------------------------------
# Kernel 1: fused linear projections.
#   For every projection p:  Y[p] = X[p] @ W[p] + b[p]
#   One pallas_call, grid over projection blocks of size bd; weights stream in
#   bf16, the matmul accumulates in f32 on the MXU.
# -----------------------------------------------------------------------------
def _fused_linear_kernel(x_ref, w_ref, b_ref, o_ref):
    # x_ref: (bd, n_ctx, ctx_dim)   working dtype
    # w_ref: (bd, ctx_dim, vw)      bf16 (weight stream is the HBM bottleneck)
    # b_ref: (bd, 1, vw)            f32
    # o_ref: (bd, n_ctx, vw)        working dtype
    x = x_ref[...].astype(w_ref.dtype)          # cheap VPU cast; keeps MXU on bf16 path
    acc = jnp.einsum("bcd,bdv->bcv", x, w_ref[...],
                     preferred_element_type=jnp.float32)
    o_ref[...] = (acc + b_ref[...].astype(jnp.float32)).astype(o_ref.dtype)


def fused_linear(x, w, b, *, out_dtype=None):
    """x: (n_proj, n_ctx, ctx_dim), w: (n_proj, ctx_dim, vw) bf16, b: (n_proj, 1, vw)."""
    n_proj, n_ctx, ctx_dim = x.shape
    vw = w.shape[-1]
    out_dtype = out_dtype or x.dtype

    # bd = projections per grid step:
    #   - <= 2 so double-buffered bf16 weight tiles stay tiny vs v5e's 16 MiB
    #     scoped VMEM (and well under v7x's 64 MiB physical),
    #   - keep >= 2 grid steps so the "parallel" depth axis still spans both
    #     v7x TensorCores,
    #   - require exact divisibility to avoid a ragged tail block.
    bd = 2 if (n_proj >= 4 and n_proj % 2 == 0) else 1
    grid = (n_proj // bd,)

    nbytes = lambda a: a.size * jnp.dtype(a.dtype).itemsize
    cost = pl.CostEstimate(
        flops=2 * n_proj * n_ctx * ctx_dim * vw,
        transcendentals=0,
        bytes_accessed=int(nbytes(x) + nbytes(w) + nbytes(b)
                           + n_proj * n_ctx * vw * jnp.dtype(out_dtype).itemsize),
    )

    return pl.pallas_call(
        _fused_linear_kernel,
        out_shape=jax.ShapeDtypeStruct((n_proj, n_ctx, vw), out_dtype),
        grid=grid,
        in_specs=[
            pl.BlockSpec((bd, n_ctx, ctx_dim), lambda p: (p, 0, 0)),
            pl.BlockSpec((bd, ctx_dim, vw), lambda p: (p, 0, 0)),
            pl.BlockSpec((bd, 1, vw), lambda p: (p, 0, 0)),
        ],
        out_specs=pl.BlockSpec((bd, n_ctx, vw), lambda p: (p, 0, 0)),
        cost_estimate=cost,
        compiler_params=pltpu.CompilerParams(
            dimension_semantics=("parallel",)),
    )(x, w, b)


# -----------------------------------------------------------------------------
# Kernel 2: construct_prompts via in-place ctx insertion.
#   Output aliases the frozen embedding; the kernel only rewrites the first
#   `head` (sublane-aligned) sequence rows of each class block with a single
#   composed full-block store:
#     row 0            : prefix (from the embedding block)
#     rows [1, 1+n_ctx): learned ctx vectors (broadcast over classes)
#     rows [1+n_ctx, head): first suffix rows (from the embedding block)
#   Rows >= head are never touched and keep the frozen suffix content through
#   the input/output alias.
# -----------------------------------------------------------------------------
def _construct_prompts_kernel(emb_ref, ctxslab_ref, o_ref, *, n_ctx):
    bc, head, d = o_ref.shape
    row = jax.lax.broadcasted_iota(jnp.int32, (head, d), 0)
    is_ctx = jnp.logical_and(row >= 1, row < 1 + n_ctx)          # (head, d)
    mask = jnp.broadcast_to(is_ctx[None, :, :], (bc, head, d))
    ctx_b = jnp.broadcast_to(ctxslab_ref[...][None, :, :], (bc, head, d))
    # Single unmasked full-block store (no sublane-offset partial overwrite).
    o_ref[...] = jnp.where(mask, ctx_b, emb_ref[...])


def construct_prompts(embedding, ctx, *, block_cls=128):
    """embedding: (n_cls, seq_len, D) frozen token embedding; ctx: (n_ctx, D).

    NOTE: correctness of rows >= `head` relies on input_output_aliases={0:0}.
    """
    n_cls, seq_len, d = embedding.shape
    n_ctx = ctx.shape[0]
    itemsize = jnp.dtype(embedding.dtype).itemsize
    # Sublane tile for this dtype: 8 rows (f32), 16 (bf16), 32 (int8/fp8).
    sublane = max(8, 32 // itemsize)
    head = min(_round_up(1 + n_ctx, sublane), seq_len)
    bc = min(block_cls, n_cls)

    # Tiny (head, d) slab with ctx in rows [1, 1+n_ctx); lets the kernel do a
    # single composed full-block store instead of copy + masked overwrite.
    ctx_slab = jnp.zeros((head, d), embedding.dtype)
    ctx_slab = ctx_slab.at[1:1 + n_ctx, :].set(ctx.astype(embedding.dtype))

    head_bytes = n_cls * head * d * itemsize
    cost = pl.CostEstimate(flops=0, transcendentals=0,
                           bytes_accessed=int(2 * head_bytes + head * d * itemsize))

    kernel = functools.partial(_construct_prompts_kernel, n_ctx=n_ctx)
    return pl.pallas_call(
        kernel,
        out_shape=jax.ShapeDtypeStruct((n_cls, seq_len, d), embedding.dtype),
        grid=(pl.cdiv(n_cls, bc),),   # ragged tail blocks are masked on writeback
        in_specs=[
            pl.BlockSpec((bc, head, d), lambda i: (i, 0, 0)),   # embedding head
            pl.BlockSpec((head, d), lambda i: (0, 0)),          # shared ctx slab
        ],
        out_specs=pl.BlockSpec((bc, head, d), lambda i: (i, 0, 0)),
        input_output_aliases={0: 0},   # embedding buffer becomes the prompts
        cost_estimate=cost,
        compiler_params=pltpu.CompilerParams(
            dimension_semantics=("parallel",)),
    )(embedding, ctx_slab)


# -----------------------------------------------------------------------------
# Parameters + functional forward.
# -----------------------------------------------------------------------------
def init_params(key, *, n_cls, n_ctx, ctx_dim, visual_width, seq_len,
                compound_prompts_depth, dtype=jnp.float32,
                proj_dtype=jnp.bfloat16):
    k_ctx, k_deep, k_w, k_emb = jax.random.split(key, 4)
    n_deep = compound_prompts_depth - 1
    n_proj = 1 + n_deep
    # Row 0: ctx ~ N(0, 0.02); rows 1..: compound prompts ~ N(0, 0.01).
    ctx = 0.02 * jax.random.normal(k_ctx, (n_ctx, ctx_dim))
    deep = 0.01 * jax.random.normal(k_deep, (n_deep, n_ctx, ctx_dim))
    prompt_stack = jnp.concatenate([ctx[None], deep], axis=0).astype(dtype)
    params = {
        "prompt_stack": prompt_stack,                              # (n_proj, n_ctx, D)
        # Stacked Linear(ctx_dim, visual_width) weights stored as W^T, bf16
        # (the weight stream dominates HBM traffic of fused_linear).
        "proj_all_w": (0.02 * jax.random.normal(
            k_w, (n_proj, ctx_dim, visual_width))).astype(proj_dtype),
        "proj_all_b": jnp.zeros((n_proj, 1, visual_width), jnp.float32),
    }
    # Frozen token embedding of the tokenized prompts (prefix|placeholder|suffix).
    # TODO(synk): CLIP tokenizer + token_embedding lookup has no Pallas
    # equivalent; a deterministic stand-in embedding is synthesized instead.
    token_embedding = (0.02 * jax.random.normal(
        k_emb, (n_cls, seq_len, ctx_dim))).astype(dtype)
    return params, token_embedding


@functools.partial(jax.jit, donate_argnames=("token_embedding",))
def forward(params, token_embedding):
    prompt_stack = params["prompt_stack"]          # (n_proj, n_ctx, D)
    ctx = prompt_stack[0]

    # prompts = cat([prefix, ctx.expand(n_cls, -1, -1), suffix], dim=1),
    # realized as an in-place head-rows rewrite of the donated embedding.
    prompts_for_text_encoder = construct_prompts(token_embedding, ctx)

    # One fused pallas_call for self.proj(ctx) and every compound projection.
    y_all = fused_linear(prompt_stack, params["proj_all_w"], params["proj_all_b"],
                         out_dtype=prompt_stack.dtype)
    shared_ctx_for_vision = y_all[0]
    visual_deep_prompts = [y_all[i] for i in range(1, y_all.shape[0])]
    compound_prompts_text = [prompt_stack[i] for i in range(1, prompt_stack.shape[0])]

    return (prompts_for_text_encoder, shared_ctx_for_vision,
            compound_prompts_text, visual_deep_prompts)


if __name__ == "__main__":
    # Small but shape-consistent configuration (lane-dense feature dims).
    n_cls = 4
    n_ctx = 4
    ctx_dim = 128            # real CLIP: 512
    visual_width = 128       # real CLIP: 768
    seq_len = 16             # real CLIP: 77
    compound_prompts_depth = 4   # -> n_proj = 4 -> bd = 2, two "parallel" steps
    dtype = jnp.float32
    proj_dtype = jnp.bfloat16

    key = jax.random.PRNGKey(0)
    params, token_embedding = init_params(
        key, n_cls=n_cls, n_ctx=n_ctx, ctx_dim=ctx_dim,
        visual_width=visual_width, seq_len=seq_len,
        compound_prompts_depth=compound_prompts_depth,
        dtype=dtype, proj_dtype=proj_dtype)

    ctx = params["prompt_stack"][0]

    # --- References (computed BEFORE the donating call; token_embedding must
    # --- not be touched after forward() runs). ------------------------------
    emb = token_embedding
    ref_prompts = jnp.concatenate(
        [emb[:, :1, :],
         jnp.broadcast_to(ctx[None], (n_cls, n_ctx, ctx_dim)),
         emb[:, 1 + n_ctx:, :]], axis=1)
    xq = params["prompt_stack"].astype(jnp.bfloat16).astype(jnp.float32)
    wq = params["proj_all_w"].astype(jnp.float32)
    ref_all = jnp.einsum("pcd,pdv->pcv", xq, wq,
                         precision=jax.lax.Precision.HIGHEST) \
        + params["proj_all_b"].astype(jnp.float32)
    jax.block_until_ready((ref_prompts, ref_all))

    # --- Run the kernels (token_embedding is donated / updated in place). ---
    prompts, shared_ctx, deep_text, deep_visual = forward(params, token_embedding)
    jax.block_until_ready((prompts, shared_ctx, deep_visual))
    del token_embedding, emb   # donated: must not be used anymore

    assert prompts.shape == (n_cls, seq_len, ctx_dim)
    assert shared_ctx.shape == (n_ctx, visual_width)
    assert len(deep_text) == compound_prompts_depth - 1
    assert len(deep_visual) == compound_prompts_depth - 1
    assert jnp.allclose(prompts, ref_prompts, atol=1e-6)
    assert jnp.allclose(shared_ctx, ref_all[0], rtol=1e-3, atol=1e-4)
    for i, v in enumerate(deep_visual):
        assert jnp.allclose(v, ref_all[i + 1], rtol=1e-3, atol=1e-4)
    for i, t in enumerate(deep_text):
        assert jnp.allclose(t, params["prompt_stack"][i + 1])

    # --- Explicit check (review concern): ragged last class block over the
    # --- aliased output (n_cls % block_cls != 0), no donation here. ---------
    n_cls2 = 5
    emb2 = (0.02 * jax.random.normal(
        jax.random.PRNGKey(1), (n_cls2, seq_len, ctx_dim))).astype(dtype)
    prompts2 = jax.jit(
        lambda e, c: construct_prompts(e, c, block_cls=4))(emb2, ctx)
    ref2 = jnp.concatenate(
        [emb2[:, :1, :],
         jnp.broadcast_to(ctx[None], (n_cls2, n_ctx, ctx_dim)),
         emb2[:, 1 + n_ctx:, :]], axis=1)
    jax.block_until_ready(prompts2)
    assert jnp.allclose(prompts2, ref2, atol=1e-6)

    print("KERNEL_OK")
</pallas_src>

<mosaic_0001>
module attributes {stable_mosaic.version = 11 : i64} {
  func.func @_fused_linear_kernel(%arg0: i32, %arg1: memref<2x4x128xf32, #tpu.memory_space<vmem>>, %arg2: memref<2x128x128xbf16, #tpu.memory_space<vmem>>, %arg3: memref<2x1x128xf32, #tpu.memory_space<vmem>>, %arg4: memref<2x4x128xf32, #tpu.memory_space<vmem>>) attributes {dimension_semantics = [#tpu.dimension_semantics<parallel>], iteration_bounds = array<i64: 2>, scalar_prefetch = 0 : i64, scratch_operands = 0 : i64, tpu.core_type = #tpu.core_type<tc>, window_params = [{transform_indices = @transform_0, window_bounds = array<i64: 2, 4, 128>}, {transform_indices = @transform_1, window_bounds = array<i64: 2, 128, 128>}, {transform_indices = @transform_2, window_bounds = array<i64: 2, 1, 128>}, {transform_indices = @transform_3, window_bounds = array<i64: 2, 4, 128>}]} {
    %c0 = arith.constant 0 : index
    %c0_0 = arith.constant 0 : index
    %c0_1 = arith.constant 0 : index
    %0 = vector.load %arg1[%c0, %c0_0, %c0_1] : memref<2x4x128xf32, #tpu.memory_space<vmem>>, vector<2x4x128xf32>
    %1 = arith.truncf %0 : vector<2x4x128xf32> to vector<2x4x128xbf16>
    %c0_2 = arith.constant 0 : index
    %c0_3 = arith.constant 0 : index
    %c0_4 = arith.constant 0 : index
    %2 = vector.load %arg2[%c0_2, %c0_3, %c0_4] : memref<2x128x128xbf16, #tpu.memory_space<vmem>>, vector<2x128x128xbf16>
    "tpu.trace_start"() <{level = 10 : i32, message = "bcd,bdv->bcv"}> : () -> ()
    %cst = arith.constant dense<0.000000e+00> : vector<2x4x128xf32>
    %3 = tpu.matmul %1, %2, %cst {dimension_numbers = #tpu.dot_dimension_numbers<[2], [1], [1], [2], [0, 0, 0, 1, 1, 2], [0], [0]>} : vector<2x4x128xbf16>, vector<2x128x128xbf16>, vector<2x4x128xf32> -> vector<2x4x128xf32>
    "tpu.trace_stop"() : () -> ()
    %c0_5 = arith.constant 0 : index
    %c0_6 = arith.constant 0 : index
    %c0_7 = arith.constant 0 : index
    %4 = vector.load %arg3[%c0_5, %c0_6, %c0_7] : memref<2x1x128xf32, #tpu.memory_space<vmem>>, vector<2x1x128xf32>
    %5 = vector.broadcast %4 : vector<2x1x128xf32> to vector<2x4x128xf32>
    %6 = arith.addf %3, %5 : vector<2x4x128xf32>
    %c0_8 = arith.constant 0 : index
    %c0_9 = arith.constant 0 : index
    %c0_10 = arith.constant 0 : index
    %7 = vector.load %arg4[%c0_8, %c0_9, %c0_10] : memref<2x4x128xf32, #tpu.memory_space<vmem>>, vector<2x4x128xf32>
    tpu.vector_store %arg4[%c0_8, %c0_9, %c0_10], %6 {strides = array<i32>} : memref<2x4x128xf32, #tpu.memory_space<vmem>>, vector<2x4x128xf32>,
    return
  }
  func.func @transform_0(%arg0: i32) -> (i32, i32, i32) {
    %c0_i32 = arith.constant 0 : i32
    %c0_i32_0 = arith.constant 0 : i32
    %c0_i32_1 = arith.constant 0 : i32
    return %arg0, %c0_i32, %c0_i32_0 : i32, i32, i32
  }
  func.func @transform_1(%arg0: i32) -> (i32, i32, i32) {
    %c0_i32 = arith.constant 0 : i32
    %c0_i32_0 = arith.constant 0 : i32
    %c0_i32_1 = arith.constant 0 : i32
    return %arg0, %c0_i32, %c0_i32_0 : i32, i32, i32
  }
  func.func @transform_2(%arg0: i32) -> (i32, i32, i32) {
    %c0_i32 = arith.constant 0 : i32
    %c0_i32_0 = arith.constant 0 : i32
    %c0_i32_1 = arith.constant 0 : i32
    return %arg0, %c0_i32, %c0_i32_0 : i32, i32, i32
  }
  func.func @transform_3(%arg0: i32) -> (i32, i32, i32) {
    %c0_i32 = arith.constant 0 : i32
    %c0_i32_0 = arith.constant 0 : i32
    %c0_i32_1 = arith.constant 0 : i32
    return %arg0, %c0_i32, %c0_i32_0 : i32, i32, i32
  }
}

module attributes {stable_mosaic.version = 11 : i64} {
  func.func @_construct_prompts_kernel(%arg0: i32, %arg1: memref<4x8x128xf32, #tpu.memory_space<vmem>>, %arg2: memref<8x128xf32, #tpu.memory_space<vmem>>, %arg3: memref<4x8x128xf32, #tpu.memory_space<vmem>>) attributes {dimension_semantics = [#tpu.dimension_semantics<parallel>], iteration_bounds = array<i64: 1>, scalar_prefetch = 0 : i64, scratch_operands = 0 : i64, tpu.core_type = #tpu.core_type<tc>, window_params = [{transform_indices = @transform_0, window_bounds = array<i64: 4, 8, 128>}, {pipeline_mode = #tpu.pipeline_mode<synchronous>, transform_indices = @transform_1, window_bounds = array<i64: 8, 128>}, {transform_indices = @transform_2, window_bounds = array<i64: 4, 8, 128>}]} {
    %0 = tpu.iota {dimensions = array<i32: 0>} : vector<8x128xi32>
    %c1_i32 = arith.constant 1 : i32
    %1 = vector.broadcast %c1_i32 : i32 to vector<8x128xi32>
    %2 = arith.cmpi sge, %0, %1 : vector<8x128xi32>
    %c5_i32 = arith.constant 5 : i32
    %3 = vector.broadcast %c5_i32 : i32 to vector<8x128xi32>
    %4 = arith.cmpi slt, %0, %3 : vector<8x128xi32>
    %5 = arith.andi %2, %4 : vector<8x128xi1>
    %6 = vector.shape_cast %5 : vector<8x128xi1> to vector<1x8x128xi1>
    %7 = vector.shape_cast %6 : vector<1x8x128xi1> to vector<1x8x128xi1>
    %8 = vector.broadcast %7 : vector<1x8x128xi1> to vector<4x8x128xi1>
    %c0 = arith.constant 0 : index
    %c0_0 = arith.constant 0 : index
    %9 = vector.load %arg2[%c0, %c0_0] : memref<8x128xf32, #tpu.memory_space<vmem>>, vector<8x128xf32>
    %10 = vector.shape_cast %9 : vector<8x128xf32> to vector<1x8x128xf32>
    %11 = vector.shape_cast %10 : vector<1x8x128xf32> to vector<1x8x128xf32>
    %12 = vector.broadcast %11 : vector<1x8x128xf32> to vector<4x8x128xf32>
    %c0_1 = arith.constant 0 : index
    %c0_2 = arith.constant 0 : index
    %c0_3 = arith.constant 0 : index
    %13 = vector.load %arg1[%c0_1, %c0_2, %c0_3] : memref<4x8x128xf32, #tpu.memory_space<vmem>>, vector<4x8x128xf32>
    %14 = arith.select %8, %12, %13 : vector<4x8x128xi1>, vector<4x8x128xf32>
    %c0_4 = arith.constant 0 : index
    %c0_5 = arith.constant 0 : index
    %c0_6 = arith.constant 0 : index
    %15 = vector.load %arg3[%c0_4, %c0_5, %c0_6] : memref<4x8x128xf32, #tpu.memory_space<vmem>>, vector<4x8x128xf32>
    tpu.vector_store %arg3[%c0_4, %c0_5, %c0_6], %14 {strides = array<i32>} : memref<4x8x128xf32, #tpu.memory_space<vmem>>, vector<4x8x128xf32>,
    return
  }
  func.func @transform_0(%arg0: i32) -> (i32, i32, i32) {
    %c0_i32 = arith.constant 0 : i32
    %c0_i32_0 = arith.constant 0 : i32
    %c0_i32_1 = arith.constant 0 : i32
    return %arg0, %c0_i32, %c0_i32_0 : i32, i32, i32
  }
  func.func @transform_1(%arg0: i32) -> (i32, i32) {
    %c0_i32 = arith.constant 0 : i32
    %c0_i32_0 = arith.constant 0 : i32
    %c0_i32_1 = arith.constant 0 : i32
    return %c0_i32, %c0_i32_0 : i32, i32
  }
  func.func @transform_2(%arg0: i32) -> (i32, i32, i32) {
    %c0_i32 = arith.constant 0 : i32
    %c0_i32_0 = arith.constant 0 : i32
    %c0_i32_1 = arith.constant 0 : i32
    return %arg0, %c0_i32, %c0_i32_0 : i32, i32, i32
  }
}

</mosaic_0001>

<llo_original>
// kernel: forward.2
$region0: #{forward.2}
  #allocation0 [shape = 'u32[]', space=smem, size = 0x4, offset = 0x4, fixed_abs, tag = 'smem constant byte address 0x4 - core index']
  #allocation1 [shape = 'u32[144,128]{1,0:T(1,128)}', space=vmem, size = 0x12000, scoped, tag = 'internal scratch']
  %s0 = inlined_call_operand.vmem [shape: f32[4,16,128], index: 0, kind: input, shape index: {}, may-alias: {0,2}]
  %s1 = inlined_call_operand.vmem [shape: f32[8,128], index: 1, kind: input, shape index: {}]
  %s2 = inlined_call_operand.vmem [shape: f32[4,16,128], index: 2, kind: output, shape index: {}, may-alias: {0,2}]
  %s3 = sld [smem:[#allocation0]]
  $region90: #{forward.2} parent=0
    _
  %s5 = ssub.s32 1, %s3
  %s6 = scalar_select 0, %s5, %s3
  $region1: #{forward.2} parent=0
    #allocation2 [shape = 'u8[16384]{0}', space=vmem, size = 0x4000, scoped, tag = 'input window, operand 0, single buffered']
    #allocation3 [shape = 'u8[16384]{0}', space=vmem, size = 0x4000, scoped, tag = 'output window, operand 0, single buffered']
    // Predicated region
    $region2: #{forward.2} parent=1 // pred_check
      _
    $region3: #{forward.2} parent=1 // pred_check_branch
      %8 = sbr.rel (0) target = $region5
    $region4: #{forward.2} parent=1 // pred_region
      // Predicated region
      $region6: #{forward.2} parent=4 // pred_check
        _
      $region7: #{forward.2} parent=4 // pred_check_branch
        %10 = sbr.rel (0) target = $region9
      $region8: #{forward.2} parent=4 // pred_region
        // Predicated region
        $region10: #{forward.2} parent=8 // pred_check
          _
        $region11: #{forward.2} parent=8 // pred_check_branch
          %12 = sbr.rel (0) target = $region13
        $region12: #{forward.2} parent=8 // pred_region
          // Predicated region
          $region25: #{forward.2} parent=12 // pred_check
            _
          $region26: #{forward.2} parent=12 // pred_check_branch
            %33 = sbr.rel (0) target = $region28
          $region27: #{forward.2} parent=12 // pred_region
            loop: start=0, step=1, limit=1
            $region29: #{forward.2} parent=27 // loop_pre_header
              _
            $region30: #{forward.2} parent=27 // loop_header
              %s35 = sphi 0, %s39
              %p36 = scmp.ge.s32.totalorder %s35, 1
              %s40 = sphi %s0, %s0
              %s41 = sphi [#allocation2], [#allocation2]
            $region31: #{forward.2} parent=27 // loop_header_branch
              %38 = sbr.rel (%p36) target = $region35
            $region32: #{forward.2} parent=27 // loop_body
              %v42 = vld [vmem:[%s40] sm:$0xff]
              %43 = vst [vmem:[%s41] sm:$0xff] %v42
              %v44 = vld [vmem:[%s40 + $0x10] sm:$0xff]
              %45 = vst [vmem:[%s41 + $0x8] sm:$0xff] %v44
              %v46 = vld [vmem:[%s40 + $0x20] sm:$0xff]
              %47 = vst [vmem:[%s41 + $0x10] sm:$0xff] %v46
              %v48 = vld [vmem:[%s40 + $0x30] sm:$0xff]
              %49 = vst [vmem:[%s41 + $0x18] sm:$0xff] %v48
            $region33: #{forward.2} parent=27 // loop_footer
              %s39 = sadd.s32 1, %s35
            $region34: #{forward.2} parent=27 // loop_footer_branch
              %34 = sbr.rel target = $region30
            $region35: #{forward.2} parent=27 // loop_exit
              _
          $region28: #{forward.2} parent=12 // pred_fallthru
            _
          // Predicated region
          $region36: #{forward.2} parent=12 // pred_check
            _
          $region37: #{forward.2} parent=12 // pred_check_branch
            %51 = sbr.rel target = $region39
          $region38: #{forward.2} parent=12 // pred_region
            _
          $region39: #{forward.2} parent=12 // pred_fallthru
            _
        $region13: #{forward.2} parent=8 // pred_fallthru
          _
        // Predicated region
        $region14: #{forward.2} parent=8 // pred_check
          _
        $region15: #{forward.2} parent=8 // pred_check_branch
          %14 = sbr.rel target = $region17
        $region16: #{forward.2} parent=8 // pred_region
          loop: start=0, step=1, limit=1
          $region18: #{forward.2} parent=16 // loop_pre_header
            _
          $region19: #{forward.2} parent=16 // loop_header
            %s17 = sphi 0, %s21
            %p18 = scmp.ge.s32.totalorder %s17, 1
            %s22 = sphi %s0, %s0
            %s23 = sphi [#allocation2], [#allocation2]
          $region20: #{forward.2} parent=16 // loop_header_branch
            %20 = sbr.rel (%p18) target = $region24
          $region21: #{forward.2} parent=16 // loop_body
            %v24 = vld [vmem:[%s22] sm:$0xff]
            %25 = vst [vmem:[%s23] sm:$0xff] %v24
            %v26 = vld [vmem:[%s22 + $0x10] sm:$0xff]
            %27 = vst [vmem:[%s23 + $0x8] sm:$0xff] %v26
            %v28 = vld [vmem:[%s22 + $0x20] sm:$0xff]
            %29 = vst [vmem:[%s23 + $0x10] sm:$0xff] %v28
            %v30 = vld [vmem:[%s22 + $0x30] sm:$0xff]
            %31 = vst [vmem:[%s23 + $0x18] sm:$0xff] %v30
          $region22: #{forward.2} parent=16 // loop_footer
            %s21 = sadd.s32 1, %s17
          $region23: #{forward.2} parent=16 // loop_footer_branch
            %16 = sbr.rel target = $region19
          $region24: #{forward.2} parent=16 // loop_exit
            _
        $region17: #{forward.2} parent=8 // pred_fallthru
          _
      $region9: #{forward.2} parent=4 // pred_fallthru
        _
      %52 = vnop
    $region5: #{forward.2} parent=1 // pred_fallthru
      _
    // Predicated region
    $region40: #{forward.2} parent=1 // pred_check
      _
    $region41: #{forward.2} parent=1 // pred_check_branch
      %54 = sbr.rel (0) target = $region43
    $region42: #{forward.2} parent=1 // pred_region
      _
    $region43: #{forward.2} parent=1 // pred_fallthru
      _
    // Predicated region
    $region44: #{forward.2} parent=1 // pred_check
      _
    $region45: #{forward.2} parent=1 // pred_check_branch
      %56 = sbr.rel (0) target = $region47
    $region46: #{forward.2} parent=1 // pred_region
      _
    $region47: #{forward.2} parent=1 // pred_fallthru
      _
    %v57 = vlaneseq
    %v58 = vshrl.u32 %v57, 7
    %vm59 = vcmp.ge.s32.totalorder %v58, 1
    %vm60 = vcmp.lt.s32.totalorder %v58, 5
    %vm61 = vmand %vm59, %vm60
    %v62 = vsel %vm61, 1, 0
    %vm63 = vcmp.eq.s32.totalorder %v62, 1
    %v64 = vld [vmem:[%s1] sm:$0xff]
    %v65 = vld [vmem:[#allocation2] sm:$0xff]
    %v66 = vld [vmem:[#allocation2 + $0x8] sm:$0xff]
    %v67 = vld [vmem:[#allocation2 + $0x10] sm:$0xff]
    %v68 = vld [vmem:[#allocation2 + $0x18] sm:$0xff]
    %v69 = vsel %vm63, %v64, %v65
    %v70 = vsel %vm63, %v64, %v66
    %v71 = vsel %vm63, %v64, %v67
    %v72 = vsel %vm63, %v64, %v68
    %73 = vst [vmem:[#allocation3] sm:$0xff] %v69
    %74 = vst [vmem:[#allocation3 + $0x8] sm:$0xff] %v70
    %75 = vst [vmem:[#allocation3 + $0x10] sm:$0xff] %v71
    %76 = vst [vmem:[#allocation3 + $0x18] sm:$0xff] %v72
    // Predicated region
    $region48: #{forward.2} parent=1 // pred_check
      _
    $region49: #{forward.2} parent=1 // pred_check_branch
      %78 = sbr.rel (0) target = $region51
    $region50: #{forward.2} parent=1 // pred_region
      // Predicated region
      $region52: #{forward.2} parent=50 // pred_check
        _
      $region53: #{forward.2} parent=50 // pred_check_branch
        %80 = sbr.rel (0) target = $region55
      $region54: #{forward.2} parent=50 // pred_region
        // Predicated region
        $region56: #{forward.2} parent=54 // pred_check
          _
        $region57: #{forward.2} parent=54 // pred_check_branch
          %82 = sbr.rel (0) target = $region59
        $region58: #{forward.2} parent=54 // pred_region
          // Predicated region
          $region71: #{forward.2} parent=58 // pred_check
            _
          $region72: #{forward.2} parent=58 // pred_check_branch
            %103 = sbr.rel (0) target = $region74
          $region73: #{forward.2} parent=58 // pred_region
            loop: start=0, step=1, limit=1
            $region75: #{forward.2} parent=73 // loop_pre_header
              _
            $region76: #{forward.2} parent=73 // loop_header
              %s105 = sphi 0, %s109
              %p106 = scmp.ge.s32.totalorder %s105, 1
              %s110 = sphi [#allocation3], [#allocation3]
              %s111 = sphi %s2, %s2
            $region77: #{forward.2} parent=73 // loop_header_branch
              %108 = sbr.rel (%p106) target = $region81
            $region78: #{forward.2} parent=73 // loop_body
              %v112 = vld [vmem:[%s110] sm:$0xff]
              %113 = vst [vmem:[%s111] sm:$0xff] %v112
              %v114 = vld [vmem:[%s110 + $0x8] sm:$0xff]
              %115 = vst [vmem:[%s111 + $0x10] sm:$0xff] %v114
              %v116 = vld [vmem:[%s110 + $0x10] sm:$0xff]
              %117 = vst [vmem:[%s111 + $0x20] sm:$0xff] %v116
              %v118 = vld [vmem:[%s110 + $0x18] sm:$0xff]
              %119 = vst [vmem:[%s111 + $0x30] sm:$0xff] %v118
            $region79: #{forward.2} parent=73 // loop_footer
              %s109 = sadd.s32 1, %s105
            $region80: #{forward.2} parent=73 // loop_footer_branch
              %104 = sbr.rel target = $region76
            $region81: #{forward.2} parent=73 // loop_exit
              _
          $region74: #{forward.2} parent=58 // pred_fallthru
            _
          // Predicated region
          $region82: #{forward.2} parent=58 // pred_check
            _
          $region83: #{forward.2} parent=58 // pred_check_branch
            %121 = sbr.rel target = $region85
          $region84: #{forward.2} parent=58 // pred_region
            _
          $region85: #{forward.2} parent=58 // pred_fallthru
            _
        $region59: #{forward.2} parent=54 // pred_fallthru
          _
        // Predicated region
        $region60: #{forward.2} parent=54 // pred_check
          _
        $region61: #{forward.2} parent=54 // pred_check_branch
          %84 = sbr.rel target = $region63
        $region62: #{forward.2} parent=54 // pred_region
          loop: start=0, step=1, limit=1
          $region64: #{forward.2} parent=62 // loop_pre_header
            _
          $region65: #{forward.2} parent=62 // loop_header
            %s87 = sphi 0, %s91
            %p88 = scmp.ge.s32.totalorder %s87, 1
            %s92 = sphi [#allocation3], [#allocation3]
            %s93 = sphi %s2, %s2
          $region66: #{forward.2} parent=62 // loop_header_branch
            %90 = sbr.rel (%p88) target = $region70
          $region67: #{forward.2} parent=62 // loop_body
            %v94 = vld [vmem:[%s92] sm:$0xff]
            %95 = vst [vmem:[%s93] sm:$0xff] %v94
            %v96 = vld [vmem:[%s92 + $0x8] sm:$0xff]
            %97 = vst [vmem:[%s93 + $0x10] sm:$0xff] %v96
            %v98 = vld [vmem:[%s92 + $0x10] sm:$0xff]
            %99 = vst [vmem:[%s93 + $0x20] sm:$0xff] %v98
            %v100 = vld [vmem:[%s92 + $0x18] sm:$0xff]
            %101 = vst [vmem:[%s93 + $0x30] sm:$0xff] %v100
          $region68: #{forward.2} parent=62 // loop_footer
            %s91 = sadd.s32 1, %s87
          $region69: #{forward.2} parent=62 // loop_footer_branch
            %86 = sbr.rel target = $region65
          $region70: #{forward.2} parent=62 // loop_exit
            _
        $region63: #{forward.2} parent=54 // pred_fallthru
          _
      $region55: #{forward.2} parent=50 // pred_fallthru
        _
      %122 = vnop
    $region51: #{forward.2} parent=1 // pred_fallthru
      _
    // Predicated region
    $region86: #{forward.2} parent=1 // pred_check
      _
    $region87: #{forward.2} parent=1 // pred_check_branch
      %124 = sbr.rel (0) target = $region89
    $region88: #{forward.2} parent=1 // pred_region
      _
    $region89: #{forward.2} parent=1 // pred_fallthru
      _

// kernel: forward.3
$region0: #{forward.3}
  #allocation0 [shape = 'u32[]', space=smem, size = 0x4, offset = 0x4, fixed_abs, tag = 'smem constant byte address 0x4 - core index']
  #allocation1 [shape = 'u32[144,128]{1,0:T(1,128)}', space=vmem, size = 0x12000, scoped, tag = 'internal scratch']
  %s0 = inlined_call_operand.hbm [shape: f32[4,4,128], index: 0, kind: input, shape index: {}]
  %s1 = inlined_call_operand.hbm [shape: bf16[4,128,128], index: 1, kind: input, shape index: {}]
  %s2 = inlined_call_operand.hbm [shape: f32[4,1,128], index: 2, kind: input, shape index: {}]
  %s3 = inlined_call_operand.vmem [shape: f32[4,4,128], index: 3, kind: output, shape index: {}]
  %s4 = sld [smem:[#allocation0]]
  $region57: #{forward.3} parent=0
    _
  %s6 = ssub.s32 1, %s4
  %s7 = scalar_select 0, %s6, %s4
  $region1: #{forward.3} parent=0
    #allocation2 [shape = 'u8[8192]{0}', space=vmem, size = 0x2000, scoped, tag = 'input window, operand 0']
    #allocation3 [shape = 's32[2]{0}', space=sflag, size = 0x8, scoped, tag = 'scoped memory for forward.3']
    #allocation4 [shape = 'u8[131072]{0}', space=vmem, size = 0x20000, scoped, tag = 'input window, operand 1']
    #allocation5 [shape = 's32[2]{0}', space=sflag, size = 0x8, scoped, tag = 'scoped memory for forward.3']
    #allocation6 [shape = 'u8[2048]{0}', space=vmem, size = 0x800, scoped, tag = 'input window, operand 2']
    %8 = vsyncpa [#allocation3], 0
    %s9 = scalar_lea.sflag [#allocation3], 1
    %10 = vsyncpa %s9, 0
    %11 = vsyncpa [#allocation5], 0
    %s12 = scalar_lea.sflag [#allocation5], 1
    %13 = vsyncpa %s12, 0
    loop: start=0, step=1, limit=4
    $region2: #{forward.3} parent=1 // loop_pre_header
      _
    $region3: #{forward.3} parent=1 // loop_header
      %s15 = sphi 0, %s19
      %p16 = scmp.ge.s32.totalorder %s15, 4
      %s25 = sphi 0, %s27
      %s28 = sphi 0, %s25
      %s29 = sphi 0, %s28
      %s45 = sphi 0, %s29
      %s51 = sphi 0, %s53
      %s54 = sphi 0, %s51
      %s55 = sphi 0, %s54
      %s71 = sphi 0, %s55
      %s77 = sphi 0, %s79
      %s80 = sphi 0, %s77
      %s81 = sphi 0, %s80
      %s97 = sphi 0, %s81
      %s103 = sphi 0, %s105
      %s106 = sphi 0, %s103
      %s107 = sphi 0, %s106
      %s123 = sphi 0, %s107
    $region4: #{forward.3} parent=1 // loop_header_branch
      %18 = sbr.rel (%p16) target = $region8
    $region5: #{forward.3} parent=1 // loop_body
      %s20 = ssub.s32 %s15, 1
      %s21 = ssub.s32 %s15, 2
      %s22 = sadd.s32 %s15, 1
      %s23 = ssub.s32 %s15, %s22
      %p24 = scmp.eq.s32.totalorder %s23, 0
      %s26 = sadd.s32 %s25, 1
      %s27 = scalar_select %p24, %s25, %s26
      %p30 = pneg %p24
      %p31 = scmp.eq.s32.totalorder %s15, 1
      %p32 = por %p30, %p31
      %p33 = scmp.ne.s32.totalorder %s25, %s28
      %p34 = scmp.eq.s32.totalorder %s15, 0
      %p35 = por %p33, %p34
      %p36 = scmp.ne.s32.totalorder %s25, %s28
      %p37 = scmp.eq.s32.totalorder %s20, 1
      %p38 = por %p36, %p37
      %p39 = scmp.ne.s32.totalorder %s28, %s29
      %p40 = scmp.eq.s32.totalorder %s20, 0
      %p41 = por %p39, %p40
      %p42 = scmp.ne.s32.totalorder %s28, %s29
      %p43 = scmp.eq.s32.totalorder %s21, 1
      %p44 = por %p42, %p43
      %p46 = scmp.ne.s32.totalorder %s29, %s45
      %p47 = scmp.eq.s32.totalorder %s21, 0
      %p48 = por %p46, %p47
      %s49 = ssub.s32 %s15, %s22
      %p50 = scmp.eq.s32.totalorder %s49, 0
      %s52 = sadd.s32 %s51, 1
      %s53 = scalar_select %p50, %s51, %s52
      %p56 = pneg %p50
      %p57 = scmp.eq.s32.totalorder %s15, 1
      %p58 = por %p56, %p57
      %p59 = scmp.ne.s32.totalorder %s51, %s54
      %p60 = scmp.eq.s32.totalorder %s15, 0
      %p61 = por %p59, %p60
      %p62 = scmp.ne.s32.totalorder %s51, %s54
      %p63 = scmp.eq.s32.totalorder %s20, 1
      %p64 = por %p62, %p63
      %p65 = scmp.ne.s32.totalorder %s54, %s55
      %p66 = scmp.eq.s32.totalorder %s20, 0
      %p67 = por %p65, %p66
      %p68 = scmp.ne.s32.totalorder %s54, %s55
      %p69 = scmp.eq.s32.totalorder %s21, 1
      %p70 = por %p68, %p69
      %p72 = scmp.ne.s32.totalorder %s55, %s71
      %p73 = scmp.eq.s32.totalorder %s21, 0
      %p74 = por %p72, %p73
      %s75 = ssub.s32 %s15, %s22
      %p76 = scmp.eq.s32.totalorder %s75, 0
      %s78 = sadd.s32 %s77, 1
      %s79 = scalar_select %p76, %s77, %s78
      %p82 = pneg %p76
      %p83 = scmp.eq.s32.totalorder %s15, 1
      %p84 = por %p82, %p83
      %p85 = scmp.ne.s32.totalorder %s77, %s80
      %p86 = scmp.eq.s32.totalorder %s15, 0
      %p87 = por %p85, %p86
      %p88 = scmp.ne.s32.totalorder %s77, %s80
      %p89 = scmp.eq.s32.totalorder %s20, 1
      %p90 = por %p88, %p89
      %p91 = scmp.ne.s32.totalorder %s80, %s81
      %p92 = scmp.eq.s32.totalorder %s20, 0
      %p93 = por %p91, %p92
      %p94 = scmp.ne.s32.totalorder %s80, %s81
      %p95 = scmp.eq.s32.totalorder %s21, 1
      %p96 = por %p94, %p95
      %p98 = scmp.ne.s32.totalorder %s81, %s97
      %p99 = scmp.eq.s32.totalorder %s21, 0
      %p100 = por %p98, %p99
      %s101 = ssub.s32 %s15, %s22
      %p102 = scmp.eq.s32.totalorder %s101, 0
      %s104 = sadd.s32 %s103, 1
      %s105 = scalar_select %p102, %s103, %s104
      %p108 = pneg %p102
      %p109 = scmp.eq.s32.totalorder %s15, 1
      %p110 = por %p108, %p109
      %p111 = scmp.ne.s32.totalorder %s103, %s106
      %p112 = scmp.eq.s32.totalorder %s15, 0
      %p113 = por %p111, %p112
      %p114 = scmp.ne.s32.totalorder %s103, %s106
      %p115 = scmp.eq.s32.totalorder %s20, 1
      %p116 = por %p114, %p115
      %p117 = scmp.ne.s32.totalorder %s106, %s107
      %p118 = scmp.eq.s32.totalorder %s20, 0
      %p119 = por %p117, %p118
      %p120 = scmp.ne.s32.totalorder %s106, %s107
      %p121 = scmp.eq.s32.totalorder %s21, 1
      %p122 = por %p120, %p121
      %p124 = scmp.ne.s32.totalorder %s107, %s123
      %p125 = scmp.eq.s32.totalorder %s21, 0
      %p126 = por %p124, %p125
      %p127 = scmp.le.s32.totalorder 1, %s15
      %p128 = scmp.lt.s32.totalorder %s15, 3
      %p129 = pnand %p127, %p128
      %p130 = pneg %p129
      // Predicated region
      $region9: #{forward.3} parent=5 // pred_check
        _
      $region10: #{forward.3} parent=5 // pred_check_branch
        %132 = sbr.rel (%p129) target = $region12
      $region11: #{forward.3} parent=5 // pred_region
        %s133 = ssub.s32 %s15, 1
      $region12: #{forward.3} parent=5 // pred_fallthru
        _
      %p134 = scmp.lt.s32.totalorder %s15, 2
      // Predicated region
      $region13: #{forward.3} parent=5 // pred_check
        %p135 = pneg %p134
      $region14: #{forward.3} parent=5 // pred_check_branch
        %137 = sbr.rel (%p135) target = $region16
      $region15: #{forward.3} parent=5 // pred_region
        // Predicated region
        $region17: #{forward.3} parent=15 // pred_check
          %p138 = pneg %p35
        $region18: #{forward.3} parent=15 // pred_check_branch
          %140 = sbr.rel (%p138) target = $region20
        $region19: #{forward.3} parent=15 // pred_region
          %s141 = sand.u32 %s25, 1
          %s142 = scalar_lea.sflag [#allocation3], %s141
          %s143 = sand.u32 %s25, 1
          %s144 = smul.addr %s143, 8
          %s145 = scalar_lea.vmem [#allocation2], %s144
          %s146 = smul.u32 2, %s15
          %s148 = ssub.s32 128, 128
          %149 = vsyncadd %s142, %s148
          %s150 = smul.addr %s146, 64
          %s151 = scalar_lea.hbm %s0, %s150
          %s152 = sshll.u32 %s145, 4
          %s153 = int_to_ptr.vmem [resolvable:$true] %s152
          %158 = dma.hbm_to_vmem [thread:$0]  %s151, 128, %s153, %s142, 64, 64, 4
        $region20: #{forward.3} parent=15 // pred_fallthru
          _
        // Predicated region
        $region21: #{forward.3} parent=15 // pred_check
          %p159 = pneg %p61
        $region22: #{forward.3} parent=15 // pred_check_branch
          %161 = sbr.rel (%p159) target = $region24
        $region23: #{forward.3} parent=15 // pred_region
          %s162 = sand.u32 %s15, 1
          %s163 = scalar_lea.sflag [#allocation5], %s162
          %s164 = sand.u32 %s51, 1
          %s165 = smul.addr %s164, 128
          %s166 = scalar_lea.vmem [#allocation4], %s165
          %s167 = smul.u32 2, %s15
          %s169 = ssub.s32 2048, 2048
          %170 = vsyncadd %s163, %s169
          %s171 = smul.addr %s167, 16
          %s172 = smul.addr %s171, 64
          %s173 = scalar_lea.hbm %s1, %s172
          %s174 = sshll.u32 %s166, 4
          %s175 = int_to_ptr.vmem [resolvable:$true] %s174
          %180 = dma.hbm_to_vmem [thread:$0]  %s173, 2048, %s175, %s163, 64, 64, 4
        $region24: #{forward.3} parent=15 // pred_fallthru
          _
        // Predicated region
        $region25: #{forward.3} parent=15 // pred_check
          %p181 = pneg %p87
        $region26: #{forward.3} parent=15 // pred_check_branch
          %183 = sbr.rel (%p181) target = $region28
        $region27: #{forward.3} parent=15 // pred_region
          %s184 = sand.u32 %s15, 1
          %s185 = scalar_lea.sflag [#allocation5], %s184
          %s186 = sand.u32 %s77, 1
          %s187 = smul.addr %s186, 2
          %s188 = scalar_lea.vmem [#allocation6], %s187
          %s189 = smul.u32 2, %s15
          %s191 = ssub.s32 32, 32
          %192 = vsyncadd %s185, %s191
          %s193 = smul.addr %s189, 16
          %s194 = scalar_lea.hbm %s2, %s193
          %s195 = sshll.u32 %s188, 4
          %s196 = int_to_ptr.vmem [resolvable:$true] %s195
          %201 = dma.hbm_to_vmem [thread:$0]  %s194, 32, %s196, %s185, 16, 16, 1
        $region28: #{forward.3} parent=15 // pred_fallthru
          _
      $region16: #{forward.3} parent=5 // pred_fallthru
        _
      %p202 = scmp.le.s32.totalorder 1, %s15
      %p203 = scmp.lt.s32.totalorder %s15, 3
      %p204 = pnand %p202, %p203
      %p205 = pneg %p204
      // Predicated region
      $region29: #{forward.3} parent=5 // pred_check
        _
      $region30: #{forward.3} parent=5 // pred_check_branch
        %207 = sbr.rel (%p204) target = $region32
      $region31: #{forward.3} parent=5 // pred_region
        %s208 = ssub.s32 %s15, 1
        %s209 = sand.u32 %s28, 1
        %s210 = scalar_lea.sflag [#allocation3], %s209
        %s211 = sand.u32 %s28, 1
        %s212 = smul.addr %s211, 8
        %s213 = scalar_lea.vmem [#allocation2], %s212
        // Predicated region
        $region33: #{forward.3} parent=31 // pred_check
          %p214 = pneg %p41
        $region34: #{forward.3} parent=31 // pred_check_branch
          %216 = sbr.rel (%p214) target = $region36
        $region35: #{forward.3} parent=31 // pred_region
          %217 = dma.done %s210, 128
        $region36: #{forward.3} parent=31 // pred_fallthru
          _
        %s218 = sand.u32 %s20, 1
        %s219 = scalar_lea.sflag [#allocation5], %s218
        %s220 = sand.u32 %s54, 1
        %s221 = smul.addr %s220, 128
        %s222 = scalar_lea.vmem [#allocation4], %s221
        // Predicated region
        $region37: #{forward.3} parent=31 // pred_check
          %p223 = pneg %p67
        $region38: #{forward.3} parent=31 // pred_check_branch
          %225 = sbr.rel (%p223) target = $region40
        $region39: #{forward.3} parent=31 // pred_region
          %226 = dma.done %s219, 2048
        $region40: #{forward.3} parent=31 // pred_fallthru
          _
        %s227 = sand.u32 %s20, 1
        %s228 = scalar_lea.sflag [#allocation5], %s227
        %s229 = sand.u32 %s80, 1
        %s230 = smul.addr %s229, 2
        %s231 = scalar_lea.vmem [#allocation6], %s230
        // Predicated region
        $region41: #{forward.3} parent=31 // pred_check
          %p232 = pneg %p93
        $region42: #{forward.3} parent=31 // pred_check_branch
          %234 = sbr.rel (%p232) target = $region44
        $region43: #{forward.3} parent=31 // pred_region
          %235 = dma.done %s228, 32
        $region44: #{forward.3} parent=31 // pred_fallthru
          _
        %s236 = sand.u32 %s28, 1
        %s237 = scalar_lea.sflag [#allocation3], %s236
        %s238 = sand.u32 %s28, 1
        %s239 = smul.addr %s238, 8
        %s240 = scalar_lea.vmem [#allocation2], %s239
        %p241 = pneg %p41
        %p242 = pneg %p38
        %s243 = sand.u32 %s20, 1
        %s244 = scalar_lea.sflag [#allocation5], %s243
        %s245 = sand.u32 %s54, 1
        %s246 = smul.addr %s245, 128
        %s247 = scalar_lea.vmem [#allocation4], %s246
        %p248 = pneg %p67
        %p249 = pneg %p64
        %s250 = sand.u32 %s20, 1
        %s251 = scalar_lea.sflag [#allocation5], %s250
        %s252 = sand.u32 %s80, 1
        %s253 = smul.addr %s252, 2
        %s254 = scalar_lea.vmem [#allocation6], %s253
        %p255 = pneg %p93
        %p256 = pneg %p90
        %p257 = pneg %p119
        %p258 = pneg %p116
        %s259 = smul.u32 2, %s20
        %p260 = scmp.lt.s32.totalorder %s259, 3
        %s261 = scalar_select %p260, %s259, 3
        %s262 = smul.addr %s261, 4
        %s263 = scalar_lea.vmem %s3, %s262
        %s264 = smul.u32 2, %s20
        %s265 = smul.u32 2, %s20
        %s266 = smul.u32 2, %s20
        %s267 = smul.u32 2, %s20
        %p268 = scmp.lt.s32.totalorder %s267, 3
        %s269 = scalar_select %p268, %s267, 3
        %s270 = smul.addr %s269, 4
        %s271 = scalar_lea.vmem %s3, %s270
        %s272 = smul.u32 2, %s20
        %v274 = vld [vmem:[%s213] sm:$0xf]
        %v275 = vld [vmem:[%s213 + $0x4] sm:$0xf]
        %v276 = vpack.c.bf16 %v274, %v274
        %v277 = vpack.c.bf16 %v275, %v275
        %v278 = vld [vmem:[%s222] sm:$0xf]
        %v279 = vld [vmem:[%s222 + $0x4] sm:$0xf]
        %v280 = vld [vmem:[%s222 + $0x8] sm:$0xf]
        %v281 = vld [vmem:[%s222 + $0xc] sm:$0xf]
        %v282 = vld [vmem:[%s222 + $0x10] sm:$0xf]
        %v283 = vld [vmem:[%s222 + $0x14] sm:$0xf]
        %v284 = vld [vmem:[%s222 + $0x18] sm:$0xf]
        %v285 = vld [vmem:[%s222 + $0x1c] sm:$0xf]
        %v286 = vld [vmem:[%s222 + $0x20] sm:$0xf]
        %v287 = vld [vmem:[%s222 + $0x24] sm:$0xf]
        %v288 = vld [vmem:[%s222 + $0x28] sm:$0xf]
        %v289 = vld [vmem:[%s222 + $0x2c] sm:$0xf]
        %v290 = vld [vmem:[%s222 + $0x30] sm:$0xf]
        %v291 = vld [vmem:[%s222 + $0x34] sm:$0xf]
        %v292 = vld [vmem:[%s222 + $0x38] sm:$0xf]
        %v293 = vld [vmem:[%s222 + $0x3c] sm:$0xf]
        %v294 = vld [vmem:[%s222 + $0x40] sm:$0xf]
        %v295 = vld [vmem:[%s222 + $0x44] sm:$0xf]
        %v296 = vld [vmem:[%s222 + $0x48] sm:$0xf]
        %v297 = vld [vmem:[%s222 + $0x4c] sm:$0xf]
        %v298 = vld [vmem:[%s222 + $0x50] sm:$0xf]
        %v299 = vld [vmem:[%s222 + $0x54] sm:$0xf]
        %v300 = vld [vmem:[%s222 + $0x58] sm:$0xf]
        %v301 = vld [vmem:[%s222 + $0x5c] sm:$0xf]
        %v302 = vld [vmem:[%s222 + $0x60] sm:$0xf]
        %v303 = vld [vmem:[%s222 + $0x64] sm:$0xf]
        %v304 = vld [vmem:[%s222 + $0x68] sm:$0xf]
        %v305 = vld [vmem:[%s222 + $0x6c] sm:$0xf]
        %v306 = vld [vmem:[%s222 + $0x70] sm:$0xf]
        %v307 = vld [vmem:[%s222 + $0x74] sm:$0xf]
        %v308 = vld [vmem:[%s222 + $0x78] sm:$0xf]
        %v309 = vld [vmem:[%s222 + $0x7c] sm:$0xf]
        %v310 = vld [vmem:[%s231] sm:$0x1]
        %v311 = vld [vmem:[%s231 + $0x1] sm:$0x1]
        %v314 = vlaneseq
        %v315 = vshrl.u32 %v314, 7
        %v316 = vsub.s32 0, %v315
        %v317 = vrot.slane %v310, %v316
        %v318 = vlaneseq
        %v319 = vshrl.u32 %v318, 7
        %v320 = vsub.s32 0, %v319
        %v321 = vrot.slane %v311, %v320
        %v340 = vunpack.c.l.b16 %v278
        %v341 = vunpack.c.l.b16 %v279
        %v342 = vunpack.c.l.b16 %v280
        %v343 = vunpack.c.l.b16 %v281
        %v344 = vunpack.c.l.b16 %v282
        %v345 = vunpack.c.l.b16 %v283
        %v346 = vunpack.c.l.b16 %v284
        %v347 = vunpack.c.l.b16 %v285
        %v348 = vunpack.c.l.b16 %v286
        %v349 = vunpack.c.l.b16 %v287
        %v350 = vunpack.c.l.b16 %v288
        %v351 = vunpack.c.l.b16 %v289
        %v352 = vunpack.c.l.b16 %v290
        %v353 = vunpack.c.l.b16 %v291
        %v354 = vunpack.c.l.b16 %v292
        %v355 = vunpack.c.l.b16 %v293
        %v356 = vpack.c.b16 %v341, %v340
        %v357 = vpack.c.b16 %v343, %v342
        %v358 = vpack.c.b16 %v345, %v344
        %v359 = vpack.c.b16 %v347, %v346
        %v360 = vpack.c.b16 %v349, %v348
        %v361 = vpack.c.b16 %v351, %v350
        %v362 = vpack.c.b16 %v353, %v352
        %v363 = vpack.c.b16 %v355, %v354
        %372 = vmatprep.subr.bf16.mxu0 0
        %373 = vmatpush1.bf16.msra.mxu0 %v356
        %374 = vmatprep.subr.bf16.mxu0 0
        %375 = vmatpush1.bf16.msra.mxu0 %v357
        %376 = vmatprep.subr.bf16.mxu0 0
        %377 = vmatpush1.bf16.msra.mxu0 %v358
        %378 = vmatprep.subr.bf16.mxu0 0
        %379 = vmatpush1.bf16.msra.mxu0 %v359
        %380 = vmatprep.subr.bf16.mxu0 0
        %381 = vmatpush1.bf16.msra.mxu0 %v360
        %382 = vmatprep.subr.bf16.mxu0 0
        %383 = vmatpush1.bf16.msra.mxu0 %v361
        %384 = vmatprep.subr.bf16.mxu0 0
        %385 = vmatpush1.bf16.msra.mxu0 %v362
        %386 = vmatprep.subr.bf16.mxu0 0
        %387 = vmatpush1.bf16.msra.mxu0 %v363
        %388 = vmatprep.subr.bf16.mxu0 0
        %389 = vmatpush1.bf16.msra.mxu0 0
        %390 = vmatprep.subr.bf16.mxu0 0
        %391 = vmatpush1.bf16.msra.mxu0 0
        %392 = vmatprep.subr.bf16.mxu0 0
        %393 = vmatpush1.bf16.msra.mxu0 0
        %394 = vmatprep.subr.bf16.mxu0 0
        %395 = vmatpush1.bf16.msra.mxu0 0
        %396 = vmatprep.subr.bf16.mxu0 0
        %397 = vmatpush1.bf16.msra.mxu0 0
        %398 = vmatprep.subr.bf16.mxu0 0
        %399 = vmatpush1.bf16.msra.mxu0 0
        %400 = vmatprep.subr.bf16.mxu0 0
        %401 = vmatpush1.bf16.msra.mxu0 0
        %402 = vmatprep.subr.bf16.mxu0 0
        %403 = vmatpush1.bf16.msra.mxu0 0
        %404 = vmatprep.mubr.bf16.mxu0 0
        %405 = vmatmul.mubr.bf16.gmra.mrb[0].mxu0 %v276
        %v406 = vpop.f32.mrb[0].mxu0
        %v407 = vadd.f32 %v317, %v406
        %v408 = vpop.f32.mrb[0].mxu0
        %v409 = vpop.f32.mrb[0].mxu0
        %v410 = vpop.f32.mrb[0].mxu0
        %411 = vdwg.mxu0
        %v428 = vunpack.c.l.b16 %v294
        %v429 = vunpack.c.l.b16 %v295
        %v430 = vunpack.c.l.b16 %v296
        %v431 = vunpack.c.l.b16 %v297
        %v432 = vunpack.c.l.b16 %v298
        %v433 = vunpack.c.l.b16 %v299
        %v434 = vunpack.c.l.b16 %v300
        %v435 = vunpack.c.l.b16 %v301
        %v436 = vunpack.c.l.b16 %v302
        %v437 = vunpack.c.l.b16 %v303
        %v438 = vunpack.c.l.b16 %v304
        %v439 = vunpack.c.l.b16 %v305
        %v440 = vunpack.c.l.b16 %v306
        %v441 = vunpack.c.l.b16 %v307
        %v442 = vunpack.c.l.b16 %v308
        %v443 = vunpack.c.l.b16 %v309
        %v444 = vpack.c.b16 %v429, %v428
        %v445 = vpack.c.b16 %v431, %v430
        %v446 = vpack.c.b16 %v433, %v432
        %v447 = vpack.c.b16 %v435, %v434
        %v448 = vpack.c.b16 %v437, %v436
        %v449 = vpack.c.b16 %v439, %v438
        %v450 = vpack.c.b16 %v441, %v440
        %v451 = vpack.c.b16 %v443, %v442
        %460 = vmatprep.subr.bf16.mxu0 0
        %461 = vmatpush1.bf16.msra.mxu0 %v444
        %462 = vmatprep.subr.bf16.mxu0 0
        %463 = vmatpush1.bf16.msra.mxu0 %v445
        %464 = vmatprep.subr.bf16.mxu0 0
        %465 = vmatpush1.bf16.msra.mxu0 %v446
        %466 = vmatprep.subr.bf16.mxu0 0
        %467 = vmatpush1.bf16.msra.mxu0 %v447
        %468 = vmatprep.subr.bf16.mxu0 0
        %469 = vmatpush1.bf16.msra.mxu0 %v448
        %470 = vmatprep.subr.bf16.mxu0 0
        %471 = vmatpush1.bf16.msra.mxu0 %v449
        %472 = vmatprep.subr.bf16.mxu0 0
        %473 = vmatpush1.bf16.msra.mxu0 %v450
        %474 = vmatprep.subr.bf16.mxu0 0
        %475 = vmatpush1.bf16.msra.mxu0 %v451
        %476 = vmatprep.subr.bf16.mxu0 0
        %477 = vmatpush1.bf16.msra.mxu0 0
        %478 = vmatprep.subr.bf16.mxu0 0
        %479 = vmatpush1.bf16.msra.mxu0 0
        %480 = vmatprep.subr.bf16.mxu0 0
        %481 = vmatpush1.bf16.msra.mxu0 0
        %482 = vmatprep.subr.bf16.mxu0 0
        %483 = vmatpush1.bf16.msra.mxu0 0
        %484 = vmatprep.subr.bf16.mxu0 0
        %485 = vmatpush1.bf16.msra.mxu0 0
        %486 = vmatprep.subr.bf16.mxu0 0
        %487 = vmatpush1.bf16.msra.mxu0 0
        %488 = vmatprep.subr.bf16.mxu0 0
        %489 = vmatpush1.bf16.msra.mxu0 0
        %490 = vmatprep.subr.bf16.mxu0 0
        %491 = vmatpush1.bf16.msra.mxu0 0
        %492 = vmatprep.mubr.bf16.mxu0 0
        %493 = vmatmul.mubr.bf16.gmra.mrb[0].mxu0 %v277
        %v494 = vpop.f32.mrb[0].mxu0
        %v495 = vadd.f32 %v321, %v494
        %v496 = vpop.f32.mrb[0].mxu0
        %v497 = vpop.f32.mrb[0].mxu0
        %v498 = vpop.f32.mrb[0].mxu0
        %499 = vdwg.mxu0
        %500 = vst [vmem:[%s271] sm:$0xf] %v407
        %501 = vst [vmem:[%s271 + $0x4] sm:$0xf] %v495
        %s502 = smul.u32 2, %s20
        %p503 = scmp.lt.s32.totalorder %s502, 3
        %s504 = scalar_select %p503, %s502, 3
        %s505 = smul.addr %s504, 4
        %s506 = scalar_lea.vmem %s3, %s505
        // Predicated region
        $region45: #{forward.3} parent=31 // pred_check
          %p507 = pneg %p116
        $region46: #{forward.3} parent=31 // pred_check_branch
          %509 = sbr.rel (%p507) target = $region48
        $region47: #{forward.3} parent=31 // pred_region
          %s510 = smul.u32 2, %s20
        $region48: #{forward.3} parent=31 // pred_fallthru
          _
      $region32: #{forward.3} parent=5 // pred_fallthru
        _
      %p511 = scmp.le.s32.totalorder 2, %s15
      // Predicated region
      $region49: #{forward.3} parent=5 // pred_check
        %p512 = pneg %p511
      $region50: #{forward.3} parent=5 // pred_check_branch
        %514 = sbr.rel (%p512) target = $region52
      $region51: #{forward.3} parent=5 // pred_region
        %s515 = ssub.s32 %s15, 2
        // Predicated region
        $region53: #{forward.3} parent=51 // pred_check
          %p516 = pneg %p122
        $region54: #{forward.3} parent=51 // pred_check_branch
          %518 = sbr.rel (%p516) target = $region56
        $region55: #{forward.3} parent=51 // pred_region
          %s519 = smul.u32 2, %s21
          %p520 = scmp.lt.s32.totalorder %s519, 3
          %s521 = scalar_select %p520, %s519, 3
          %s522 = smul.addr %s521, 4
          %s523 = scalar_lea.vmem %s3, %s522
        $region56: #{forward.3} parent=51 // pred_fallthru
          _
      $region52: #{forward.3} parent=5 // pred_fallthru
        _
    $region6: #{forward.3} parent=1 // loop_footer
      %s19 = sadd.s32 1, %s15
    $region7: #{forward.3} parent=1 // loop_footer_branch
      %14 = sbr.rel target = $region3
    $region8: #{forward.3} parent=1 // loop_exit
      _
    %524 = vsyncpa [#allocation3], 1
    %s525 = scalar_lea.sflag [#allocation3], 1
    %526 = vsyncpa %s525, 1
    %527 = vsyncpa [#allocation5], 1
    %s528 = scalar_lea.sflag [#allocation5], 1
    %529 = vsyncpa %s528, 1

</llo_original>
